<compile_context>
chip_gen: v5e
topology: v5e:2x2
jax: 0.10.0
libtpu: 0.0.40
codegen_flags: <defaults>
</compile_context>

<pallas_src>
import math
import numpy as np
import jax
import jax.numpy as jnp
from jax.experimental import pallas as pl
from jax.experimental.pallas import tpu as pltpu


def _pool_proj_kernel(x_ref, w_ref, o_ref):
    # x_ref: (M, K)   = (B*C*Hp, pool_k*Wf) flattened pooled-window features.
    # w_ref: (K+1, L) = fused weight (AvgPool 1/pool_k folded in, pre-transposed)
    #                   with the f32->activation-dtype bias packed as the last row.
    # o_ref: (M, L)
    K = x_ref.shape[1]
    acc = jnp.dot(x_ref[...], w_ref[:K, :], preferred_element_type=jnp.float32)
    bias = w_ref[K:K + 1, :].astype(jnp.float32)
    o_ref[...] = (acc + bias).astype(o_ref.dtype)


def fuse_projection_params(proj_w, proj_b, pool_k, dtype):
    """Parameter-only prep: run ONCE at parameter-load time, not per forward.

    proj_w: (L, Wf) = Conv2d(Wf, L, kernel_size=1).weight[:, :, 0, 0]
    proj_b: (L,)
    Returns (pool_k*Wf + 1, L):
      rows [0, K)  : W_fused[p*Wf + w, l] = proj_w[l, w] / pool_k   (AvgPool fused)
      row  K       : bias
    Cast to the activation dtype so bf16 features hit the MXU as bf16 x bf16.
    (For bf16 this changes rounding order slightly vs PyTorch AvgPool+conv.)
    """
    L = proj_w.shape[0]
    w_fused = jnp.tile(proj_w.astype(jnp.float32).T / float(pool_k), (pool_k, 1))
    w_aug = jnp.concatenate(
        [w_fused, proj_b.astype(jnp.float32).reshape(1, L)], axis=0)
    return w_aug.astype(dtype)


def feature_extractor_head(features, fused_w, *, pool_k):
    """features: (B, C, Hf, Wf) NCHW backbone output.
    fused_w: (pool_k*Wf + 1, L) from fuse_projection_params (activation dtype).
    Returns (B, Hp, C, L) with Hp = Hf // pool_k (AvgPool2d drops the remainder).
    """
    B, C, Hf, Wf = features.shape
    L = fused_w.shape[1]
    Hp = Hf // pool_k
    K = pool_k * Wf
    M = B * C * Hp

    # Copy-free layout: crop the AvgPool remainder (no-op when Hf == Hp*pool_k)
    # and reshape the contiguous NCHW map so rows are (b, c, hp) and the
    # (pool_k, Wf) window is the contraction axis K. No input transpose.
    x2d = features[:, :, : Hp * pool_k, :].reshape(M, K)

    bytes_accessed = (x2d.size * x2d.dtype.itemsize
                      + fused_w.size * fused_w.dtype.itemsize
                      + M * L * features.dtype.itemsize)

    # Single block, no grid: whole problem (<100 KB) lives in VMEM; keep the
    # resident footprint well under the ~32 MiB scoped default if M/K ever grow.
    out2d = pl.pallas_call(
        _pool_proj_kernel,
        out_shape=jax.ShapeDtypeStruct((M, L), features.dtype),
        in_specs=[
            pl.BlockSpec(memory_space=pltpu.MemorySpace.VMEM),
            pl.BlockSpec(memory_space=pltpu.MemorySpace.VMEM),
        ],
        out_specs=pl.BlockSpec(memory_space=pltpu.MemorySpace.VMEM),
        cost_estimate=pl.CostEstimate(
            flops=2 * M * K * L,
            transcendentals=0,
            bytes_accessed=bytes_accessed),
    )(x2d, fused_w)

    # Hp/C swap done on the small output (B*C*Hp*L elems), not the input.
    return jnp.transpose(out2d.reshape(B, C, Hp, L), (0, 2, 1, 3))


def _ref_forward(features, proj_w, proj_b, pool_k):
    # Pure-JAX reference of pool + apply_projection (PyTorch semantics).
    B, C, Hf, Wf = features.shape
    Hp = Hf // pool_k
    pooled = features[:, :, : Hp * pool_k, :].reshape(
        B, C, Hp, pool_k, Wf).mean(axis=3)
    # out[b, hp, c, l] = sum_w pooled[b, c, hp, w] * W[l, w] + bias[l]
    return jnp.einsum("bchw,lw->bhcl", pooled, proj_w,
                      precision=jax.lax.Precision.HIGHEST) + proj_b


if __name__ == "__main__":
    # Shapes consistent with FeatureExtractor(input_size=(256, 128), output_len=20)
    # after a stride-32 backbone: Wf = ceil(256/32) = 8, pool_k = ceil(128/32) = 4.
    # Hf = 9 (> pool_k, with a remainder) so Hp = 2: exercises the pooling
    # stride, the floor-crop, and the output-side Hp/C transpose (the real
    # backbone typically gives Hp == 1). Reduced channel count C = 64.
    in_w, in_h = 256, 128
    pool_k = math.ceil(in_h / 32)          # 4
    Wf = math.ceil(in_w / 32)              # 8
    Hf = 9
    B, C, L = 2, 64, 20

    key = jax.random.PRNGKey(0)
    k1, k2, k3 = jax.random.split(key, 3)
    feats = jax.random.normal(k1, (B, C, Hf, Wf), dtype=jnp.float32)
    # Deterministic synthetic Conv2d(Wf, L, 1) parameters.
    proj_w = 0.1 * jax.random.normal(k2, (L, Wf), dtype=jnp.float32)
    proj_b = 0.1 * jax.random.normal(k3, (L,), dtype=jnp.float32)

    # Parameter fusion is load-time work (hoisted out of the per-call path).
    fused_w = jax.block_until_ready(
        fuse_projection_params(proj_w, proj_b, pool_k, feats.dtype))

    head = jax.jit(feature_extractor_head, static_argnames=("pool_k",))
    out = jax.block_until_ready(head(feats, fused_w, pool_k=pool_k))

    ref = _ref_forward(feats, proj_w, proj_b, pool_k)
    Hp = Hf // pool_k
    assert out.shape == (B, Hp, C, L), out.shape
    np.testing.assert_allclose(np.asarray(out), np.asarray(ref),
                               rtol=1e-5, atol=1e-5)
    print("KERNEL_OK")
</pallas_src>

<mosaic_0001>
module attributes {stable_mosaic.version = 11 : i64} {
  func.func @_pool_proj_kernel(%arg0: memref<256x32xf32, #tpu.memory_space<vmem>>, %arg1: memref<33x20xf32, #tpu.memory_space<vmem>>, %arg2: memref<256x20xf32, #tpu.memory_space<vmem>>) attributes {dimension_semantics = [], scalar_prefetch = 0 : i64, scratch_operands = 0 : i64, tpu.core_type = #tpu.core_type<tc>} {
    %c0 = arith.constant 0 : index
    %c0_0 = arith.constant 0 : index
    %0 = vector.load %arg0[%c0, %c0_0] : memref<256x32xf32, #tpu.memory_space<vmem>>, vector<256x32xf32>
    %c0_1 = arith.constant 0 : index
    %c0_2 = arith.constant 0 : index
    %1 = vector.load %arg1[%c0_1, %c0_2] : memref<33x20xf32, #tpu.memory_space<vmem>>, vector<32x20xf32>
    %cst = arith.constant dense<0.000000e+00> : vector<256x20xf32>
    %2 = tpu.matmul %0, %1, %cst {dimension_numbers = #tpu.dot_dimension_numbers<[1], [0], [0], [1], [0, 0, 1, 1], [], []>} : vector<256x32xf32>, vector<32x20xf32>, vector<256x20xf32> -> vector<256x20xf32>
    %c32 = arith.constant 32 : index
    %c0_3 = arith.constant 0 : index
    %3 = vector.load %arg1[%c32, %c0_3] : memref<33x20xf32, #tpu.memory_space<vmem>>, vector<1x20xf32>
    %4 = vector.broadcast %3 : vector<1x20xf32> to vector<256x20xf32>
    %5 = arith.addf %2, %4 : vector<256x20xf32>
    %c0_4 = arith.constant 0 : index
    %c0_5 = arith.constant 0 : index
    %6 = vector.load %arg2[%c0_4, %c0_5] : memref<256x20xf32, #tpu.memory_space<vmem>>, vector<256x20xf32>
    tpu.vector_store %arg2[%c0_4, %c0_5], %5 {strides = array<i32>} : memref<256x20xf32, #tpu.memory_space<vmem>>, vector<256x20xf32>,
    return
  }
}

</mosaic_0001>

<llo_original>
// kernel: feature_extractor_head.1
$region0: #{feature_extractor_head.1}
  #allocation0 [shape = 'u32[]', space=smem, size = 0x4, offset = 0x4, fixed_abs, tag = 'smem constant byte address 0x4 - core index']
  #allocation1 [shape = 'u32[72,128]{1,0:T(1,128)}', space=vmem, size = 0x9000, scoped, tag = 'internal scratch']
  %s0 = inlined_call_operand.vmem [shape: f32[256,32], index: 0, kind: input, shape index: {}]
  %s1 = inlined_call_operand.vmem [shape: f32[33,20], index: 1, kind: input, shape index: {}]
  %s2 = inlined_call_operand.vmem [shape: f32[256,20], index: 2, kind: output, shape index: {}]
  %s3 = sld [smem:[#allocation0]]
  $region18: #{feature_extractor_head.1} parent=0
    _
  %s5 = ssub.s32 1, %s3
  %s6 = scalar_select 0, %s5, %s3
  // Predicated region
  $region2: #{feature_extractor_head.1} parent=0 // pred_check
    _
  $region3: #{feature_extractor_head.1} parent=0 // pred_check_branch
    %8 = sbr.rel (0) target = $region5
  $region4: #{feature_extractor_head.1} parent=0 // pred_region
    _
  $region5: #{feature_extractor_head.1} parent=0 // pred_fallthru
    _
  // Predicated region
  $region6: #{feature_extractor_head.1} parent=0 // pred_check
    _
  $region7: #{feature_extractor_head.1} parent=0 // pred_check_branch
    %10 = sbr.rel (0) target = $region9
  $region8: #{feature_extractor_head.1} parent=0 // pred_region
    _
  $region9: #{feature_extractor_head.1} parent=0 // pred_fallthru
    _
  %v11 = vld [vmem:[%s0] sm:$0xff]
  %v12 = vld [vmem:[%s0 + $0x8] sm:$0xff]
  %v13 = vld [vmem:[%s0 + $0x10] sm:$0xff]
  %v14 = vld [vmem:[%s0 + $0x18] sm:$0xff]
  %v15 = vld [vmem:[%s0 + $0x20] sm:$0xff]
  %v16 = vld [vmem:[%s0 + $0x28] sm:$0xff]
  %v17 = vld [vmem:[%s0 + $0x30] sm:$0xff]
  %v18 = vld [vmem:[%s0 + $0x38] sm:$0xff]
  %v19 = vld [vmem:[%s0 + $0x40] sm:$0xff]
  %v20 = vld [vmem:[%s0 + $0x48] sm:$0xff]
  %v21 = vld [vmem:[%s0 + $0x50] sm:$0xff]
  %v22 = vld [vmem:[%s0 + $0x58] sm:$0xff]
  %v23 = vld [vmem:[%s0 + $0x60] sm:$0xff]
  %v24 = vld [vmem:[%s0 + $0x68] sm:$0xff]
  %v25 = vld [vmem:[%s0 + $0x70] sm:$0xff]
  %v26 = vld [vmem:[%s0 + $0x78] sm:$0xff]
  %v27 = vld [vmem:[%s0 + $0x80] sm:$0xff]
  %v28 = vld [vmem:[%s0 + $0x88] sm:$0xff]
  %v29 = vld [vmem:[%s0 + $0x90] sm:$0xff]
  %v30 = vld [vmem:[%s0 + $0x98] sm:$0xff]
  %v31 = vld [vmem:[%s0 + $0xa0] sm:$0xff]
  %v32 = vld [vmem:[%s0 + $0xa8] sm:$0xff]
  %v33 = vld [vmem:[%s0 + $0xb0] sm:$0xff]
  %v34 = vld [vmem:[%s0 + $0xb8] sm:$0xff]
  %v35 = vld [vmem:[%s0 + $0xc0] sm:$0xff]
  %v36 = vld [vmem:[%s0 + $0xc8] sm:$0xff]
  %v37 = vld [vmem:[%s0 + $0xd0] sm:$0xff]
  %v38 = vld [vmem:[%s0 + $0xd8] sm:$0xff]
  %v39 = vld [vmem:[%s0 + $0xe0] sm:$0xff]
  %v40 = vld [vmem:[%s0 + $0xe8] sm:$0xff]
  %v41 = vld [vmem:[%s0 + $0xf0] sm:$0xff]
  %v42 = vld [vmem:[%s0 + $0xf8] sm:$0xff]
  %v43 = vld [vmem:[%s1] sm:$0xff]
  %v44 = vld [vmem:[%s1 + $0x8] sm:$0xff]
  %v45 = vld [vmem:[%s1 + $0x10] sm:$0xff]
  %v46 = vld [vmem:[%s1 + $0x18] sm:$0xff]
  %v47 = vld [vmem:[%s1 + $0x20] sm:$0x1]
  %v48 = vperm.slane %v47, 0
  %vm49 = vcmask 261120
  %v51 = vsel %vm49, %v11, 0
  %v54 = vsel %vm49, %v12, 0
  %v57 = vsel %vm49, %v13, 0
  %v60 = vsel %vm49, %v14, 0
  %v63 = vsel %vm49, %v15, 0
  %v66 = vsel %vm49, %v16, 0
  %v69 = vsel %vm49, %v17, 0
  %v72 = vsel %vm49, %v18, 0
  %v75 = vsel %vm49, %v19, 0
  %v78 = vsel %vm49, %v20, 0
  %v81 = vsel %vm49, %v21, 0
  %v84 = vsel %vm49, %v22, 0
  %v87 = vsel %vm49, %v23, 0
  %v90 = vsel %vm49, %v24, 0
  %v93 = vsel %vm49, %v25, 0
  %v96 = vsel %vm49, %v26, 0
  %v99 = vsel %vm49, %v27, 0
  %v102 = vsel %vm49, %v28, 0
  %v105 = vsel %vm49, %v29, 0
  %v108 = vsel %vm49, %v30, 0
  %v111 = vsel %vm49, %v31, 0
  %v114 = vsel %vm49, %v32, 0
  %v117 = vsel %vm49, %v33, 0
  %v120 = vsel %vm49, %v34, 0
  %v123 = vsel %vm49, %v35, 0
  %v126 = vsel %vm49, %v36, 0
  %v129 = vsel %vm49, %v37, 0
  %v132 = vsel %vm49, %v38, 0
  %v135 = vsel %vm49, %v39, 0
  %v138 = vsel %vm49, %v40, 0
  %v141 = vsel %vm49, %v41, 0
  %v144 = vsel %vm49, %v42, 0
  %146 = vmatpush.msra.mxu0 0.0
  %147 = vmatpush.msra.mxu0 0.0
  %148 = vmatpush.msra.mxu0 0.0
  %149 = vmatpush.msra.mxu0 0.0
  %150 = vmatpush.msra.mxu0 0.0
  %151 = vmatpush.msra.mxu0 0.0
  %152 = vmatpush.msra.mxu0 0.0
  %153 = vmatpush.msra.mxu0 0.0
  %154 = vmatpush.msra.mxu0 0.0
  %155 = vmatpush.msra.mxu0 0.0
  %156 = vmatpush.msra.mxu0 0.0
  %157 = vmatpush.msra.mxu0 0.0
  %158 = vmatpush.msra.mxu0 %v46
  %159 = vmatpush.msra.mxu0 %v45
  %160 = vmatpush.msra.mxu0 %v44
  %161 = vmatpush.msra.mxu0 %v43
  %162 = vmatmul.f32.gmra.mxu0 %v51
  %v163 = vpop.f32.mrf.mxu0
  %v164 = vadd.f32 %v48, %v163
  %165 = vmatmul.f32.gmra.mxu0 %v54
  %v166 = vpop.f32.mrf.mxu0
  %v167 = vadd.f32 %v48, %v166
  %168 = vmatmul.f32.gmra.mxu0 %v57
  %v169 = vpop.f32.mrf.mxu0
  %v170 = vadd.f32 %v48, %v169
  %171 = vmatmul.f32.gmra.mxu0 %v60
  %v172 = vpop.f32.mrf.mxu0
  %v173 = vadd.f32 %v48, %v172
  %174 = vmatmul.f32.gmra.mxu0 %v63
  %v175 = vpop.f32.mrf.mxu0
  %v176 = vadd.f32 %v48, %v175
  %177 = vmatmul.f32.gmra.mxu0 %v66
  %v178 = vpop.f32.mrf.mxu0
  %v179 = vadd.f32 %v48, %v178
  %180 = vmatmul.f32.gmra.mxu0 %v69
  %v181 = vpop.f32.mrf.mxu0
  %v182 = vadd.f32 %v48, %v181
  %183 = vmatmul.f32.gmra.mxu0 %v72
  %v184 = vpop.f32.mrf.mxu0
  %v185 = vadd.f32 %v48, %v184
  %186 = vmatmul.f32.gmra.mxu0 %v75
  %v187 = vpop.f32.mrf.mxu0
  %v188 = vadd.f32 %v48, %v187
  %189 = vmatmul.f32.gmra.mxu0 %v78
  %v190 = vpop.f32.mrf.mxu0
  %v191 = vadd.f32 %v48, %v190
  %192 = vmatmul.f32.gmra.mxu0 %v81
  %v193 = vpop.f32.mrf.mxu0
  %v194 = vadd.f32 %v48, %v193
  %195 = vmatmul.f32.gmra.mxu0 %v84
  %v196 = vpop.f32.mrf.mxu0
  %v197 = vadd.f32 %v48, %v196
  %198 = vmatmul.f32.gmra.mxu0 %v87
  %v199 = vpop.f32.mrf.mxu0
  %v200 = vadd.f32 %v48, %v199
  %201 = vmatmul.f32.gmra.mxu0 %v90
  %v202 = vpop.f32.mrf.mxu0
  %v203 = vadd.f32 %v48, %v202
  %204 = vmatmul.f32.gmra.mxu0 %v93
  %v205 = vpop.f32.mrf.mxu0
  %v206 = vadd.f32 %v48, %v205
  %207 = vmatmul.f32.gmra.mxu0 %v96
  %v208 = vpop.f32.mrf.mxu0
  %v209 = vadd.f32 %v48, %v208
  %210 = vmatmul.f32.gmra.mxu0 %v99
  %v211 = vpop.f32.mrf.mxu0
  %v212 = vadd.f32 %v48, %v211
  %213 = vmatmul.f32.gmra.mxu0 %v102
  %v214 = vpop.f32.mrf.mxu0
  %v215 = vadd.f32 %v48, %v214
  %216 = vmatmul.f32.gmra.mxu0 %v105
  %v217 = vpop.f32.mrf.mxu0
  %v218 = vadd.f32 %v48, %v217
  %219 = vmatmul.f32.gmra.mxu0 %v108
  %v220 = vpop.f32.mrf.mxu0
  %v221 = vadd.f32 %v48, %v220
  %222 = vmatmul.f32.gmra.mxu0 %v111
  %v223 = vpop.f32.mrf.mxu0
  %v224 = vadd.f32 %v48, %v223
  %225 = vmatmul.f32.gmra.mxu0 %v114
  %v226 = vpop.f32.mrf.mxu0
  %v227 = vadd.f32 %v48, %v226
  %228 = vmatmul.f32.gmra.mxu0 %v117
  %v229 = vpop.f32.mrf.mxu0
  %v230 = vadd.f32 %v48, %v229
  %231 = vmatmul.f32.gmra.mxu0 %v120
  %v232 = vpop.f32.mrf.mxu0
  %v233 = vadd.f32 %v48, %v232
  %234 = vmatmul.f32.gmra.mxu0 %v123
  %v235 = vpop.f32.mrf.mxu0
  %v236 = vadd.f32 %v48, %v235
  %237 = vmatmul.f32.gmra.mxu0 %v126
  %v238 = vpop.f32.mrf.mxu0
  %v239 = vadd.f32 %v48, %v238
  %240 = vmatmul.f32.gmra.mxu0 %v129
  %v241 = vpop.f32.mrf.mxu0
  %v242 = vadd.f32 %v48, %v241
  %243 = vmatmul.f32.gmra.mxu0 %v132
  %v244 = vpop.f32.mrf.mxu0
  %v245 = vadd.f32 %v48, %v244
  %246 = vmatmul.f32.gmra.mxu0 %v135
  %v247 = vpop.f32.mrf.mxu0
  %v248 = vadd.f32 %v48, %v247
  %249 = vmatmul.f32.gmra.mxu0 %v138
  %v250 = vpop.f32.mrf.mxu0
  %v251 = vadd.f32 %v48, %v250
  %252 = vmatmul.f32.gmra.mxu0 %v141
  %v253 = vpop.f32.mrf.mxu0
  %v254 = vadd.f32 %v48, %v253
  %255 = vmatmul.f32.gmra.mxu0 %v144
  %v256 = vpop.f32.mrf.mxu0
  %v257 = vadd.f32 %v48, %v256
  %258 = vdwg.mxu0
  %vm259 = vcmask 162816
  %260 = vst.msk [vmem:[%s2] sm:$0xff] %vm259, %v164
  %261 = vst.msk [vmem:[%s2 + $0x8] sm:$0xff] %vm259, %v167
  %262 = vst.msk [vmem:[%s2 + $0x10] sm:$0xff] %vm259, %v170
  %263 = vst.msk [vmem:[%s2 + $0x18] sm:$0xff] %vm259, %v173
  %264 = vst.msk [vmem:[%s2 + $0x20] sm:$0xff] %vm259, %v176
  %265 = vst.msk [vmem:[%s2 + $0x28] sm:$0xff] %vm259, %v179
  %266 = vst.msk [vmem:[%s2 + $0x30] sm:$0xff] %vm259, %v182
  %267 = vst.msk [vmem:[%s2 + $0x38] sm:$0xff] %vm259, %v185
  %268 = vst.msk [vmem:[%s2 + $0x40] sm:$0xff] %vm259, %v188
  %269 = vst.msk [vmem:[%s2 + $0x48] sm:$0xff] %vm259, %v191
  %270 = vst.msk [vmem:[%s2 + $0x50] sm:$0xff] %vm259, %v194
  %271 = vst.msk [vmem:[%s2 + $0x58] sm:$0xff] %vm259, %v197
  %272 = vst.msk [vmem:[%s2 + $0x60] sm:$0xff] %vm259, %v200
  %273 = vst.msk [vmem:[%s2 + $0x68] sm:$0xff] %vm259, %v203
  %274 = vst.msk [vmem:[%s2 + $0x70] sm:$0xff] %vm259, %v206
  %275 = vst.msk [vmem:[%s2 + $0x78] sm:$0xff] %vm259, %v209
  %276 = vst.msk [vmem:[%s2 + $0x80] sm:$0xff] %vm259, %v212
  %277 = vst.msk [vmem:[%s2 + $0x88] sm:$0xff] %vm259, %v215
  %278 = vst.msk [vmem:[%s2 + $0x90] sm:$0xff] %vm259, %v218
  %279 = vst.msk [vmem:[%s2 + $0x98] sm:$0xff] %vm259, %v221
  %280 = vst.msk [vmem:[%s2 + $0xa0] sm:$0xff] %vm259, %v224
  %281 = vst.msk [vmem:[%s2 + $0xa8] sm:$0xff] %vm259, %v227
  %282 = vst.msk [vmem:[%s2 + $0xb0] sm:$0xff] %vm259, %v230
  %283 = vst.msk [vmem:[%s2 + $0xb8] sm:$0xff] %vm259, %v233
  %284 = vst.msk [vmem:[%s2 + $0xc0] sm:$0xff] %vm259, %v236
  %285 = vst.msk [vmem:[%s2 + $0xc8] sm:$0xff] %vm259, %v239
  %286 = vst.msk [vmem:[%s2 + $0xd0] sm:$0xff] %vm259, %v242
  %287 = vst.msk [vmem:[%s2 + $0xd8] sm:$0xff] %vm259, %v245
  %288 = vst.msk [vmem:[%s2 + $0xe0] sm:$0xff] %vm259, %v248
  %289 = vst.msk [vmem:[%s2 + $0xe8] sm:$0xff] %vm259, %v251
  %290 = vst.msk [vmem:[%s2 + $0xf0] sm:$0xff] %vm259, %v254
  %291 = vst.msk [vmem:[%s2 + $0xf8] sm:$0xff] %vm259, %v257
  // Predicated region
  $region10: #{feature_extractor_head.1} parent=0 // pred_check
    _
  $region11: #{feature_extractor_head.1} parent=0 // pred_check_branch
    %293 = sbr.rel (0) target = $region13
  $region12: #{feature_extractor_head.1} parent=0 // pred_region
    _
  $region13: #{feature_extractor_head.1} parent=0 // pred_fallthru
    _
  // Predicated region
  $region14: #{feature_extractor_head.1} parent=0 // pred_check
    _
  $region15: #{feature_extractor_head.1} parent=0 // pred_check_branch
    %295 = sbr.rel (0) target = $region17
  $region16: #{feature_extractor_head.1} parent=0 // pred_region
    _
  $region17: #{feature_extractor_head.1} parent=0 // pred_fallthru
    _

</llo_original>
